<compile_context>
chip_gen: v6e
topology: v6e:2x2x1
jax: 0.10.0
libtpu: 0.0.40
codegen_flags: <defaults>
</compile_context>

<pallas_src>
import math

import jax
import jax.numpy as jnp
import numpy as np
from jax import lax
from jax.experimental import pallas as pl
from jax.experimental.pallas import tpu as pltpu


# ----------------------------------------------------------------------------
# tiling helpers
# ----------------------------------------------------------------------------
def _pick_head_group(n_head, d_v):
    """Smallest head group whose concatenated value dim is a multiple of 128 lanes."""
    for g in range(1, n_head + 1):
        if n_head % g == 0 and (g * d_v) % 128 == 0:
            return g
    return n_head  # fall back to all heads (full-dim output block is always legal)


def _pick_q_tile(l_q, cap=256):
    """Largest multiple-of-8 divisor of l_q up to `cap`; full length if none."""
    if l_q <= cap:
        return l_q
    best = l_q
    for t in range(8, cap + 1, 8):
        if l_q % t == 0:
            best = t
    return best


# ----------------------------------------------------------------------------
# Pallas scaled-dot-product-attention kernel
# ----------------------------------------------------------------------------
def _make_sdpa_kernel(inv_temp, hg, with_mask, with_attn):
    def kernel(*refs):
        if with_mask:
            q_ref, k_ref, v_ref, m_ref = refs[:4]
            rest = refs[4:]
        else:
            q_ref, k_ref, v_ref = refs[:3]
            m_ref = None
            rest = refs[3:]
        out_ref = rest[0]
        attn_ref = rest[1] if with_attn else None

        q = q_ref[0] * inv_temp          # (HG, tq, Dk) bf16, 1/temperature folded in
        k = k_ref[0]                     # (HG, Lk, Dk) bf16
        v = v_ref[0]                     # (HG, Lk, Dv) bf16

        # scores[h, i, j] = sum_d q[h, i, d] * k[h, j, d]   (no in-kernel transpose)
        scores = lax.dot_general(
            q, k,
            dimension_numbers=(((2,), (2,)), ((0,), (0,))),
            preferred_element_type=jnp.float32)            # (HG, tq, Lk) f32
        if with_mask:
            m = m_ref[0]                                   # (tq, Lk), shared by all heads
            scores = jnp.where(m[None, :, :] == 0, jnp.float32(-1e9), scores)

        # numerically-stable softmax in f32
        scores = scores - jnp.max(scores, axis=-1, keepdims=True)
        e = jnp.exp(scores)
        attn = e * pl.reciprocal(jnp.sum(e, axis=-1, keepdims=True), approx=True)

        # attn @ v per head, concatenated along lanes -> one lane-dense
        # (tq, HG*Dv) store in the (B, Lq, H*Dv) output layout.
        attn_bf = attn.astype(jnp.bfloat16)
        outs = [jnp.dot(attn_bf[h], v[h], preferred_element_type=jnp.float32)
                for h in range(hg)]
        out2d = outs[0] if hg == 1 else jnp.concatenate(outs, axis=-1)
        out_ref[0] = out2d.astype(out_ref.dtype)

        if with_attn:
            attn_ref[0] = attn.astype(attn_ref.dtype)

    return kernel


def scaled_dot_product_attention(q, k, v, temperature, mask=None, *,
                                 return_attn=True, flat_output=False,
                                 attn_dtype=jnp.bfloat16, out_dtype=None):
    """q:(B,H,Lq,Dk)  k:(B,H,Lk,Dk)  v:(B,H,Lk,Dv)
    mask: None, or broadcastable to (B, Lq, Lk) / (B, 1, Lq, Lk)  (shared across heads).
    Returns (out, attn): out is (B,H,Lq,Dv), or (B,Lq,H*Dv) if flat_output=True."""
    B, H, Lq, Dk = q.shape
    Lk = k.shape[2]
    Dv = v.shape[3]
    out_dtype = out_dtype or q.dtype

    hg = _pick_head_group(H, Dv)
    tq = _pick_q_tile(Lq)
    grid = (B, H // hg, Lq // tq)

    # bf16 MXU inputs (halves q/k/v DMA bytes, full MXU rate); accumulation stays f32.
    qb = q.astype(jnp.bfloat16)
    kb = k.astype(jnp.bfloat16)
    vb = v.astype(jnp.bfloat16)

    in_specs = [
        pl.BlockSpec((1, hg, tq, Dk), lambda b, g, i: (b, g, i, 0)),
        pl.BlockSpec((1, hg, Lk, Dk), lambda b, g, i: (b, g, 0, 0)),
        pl.BlockSpec((1, hg, Lk, Dv), lambda b, g, i: (b, g, 0, 0)),
    ]
    inputs = [qb, kb, vb]

    with_mask = mask is not None
    if with_mask:
        m = mask
        if m.ndim == 4:              # (B, 1, Lq, Lk) as produced by MHA.forward
            m = m[:, 0]
        # keep the mask at its natural per-batch shape: no H-fold broadcast.
        m = jnp.broadcast_to(m, (B, Lq, Lk)).astype(jnp.float32)
        in_specs.append(pl.BlockSpec((1, tq, Lk), lambda b, g, i: (b, i, 0)))
        inputs.append(m)

    out_shapes = [jax.ShapeDtypeStruct((B, Lq, H * Dv), out_dtype)]
    out_specs = [pl.BlockSpec((1, tq, hg * Dv), lambda b, g, i: (b, i, g))]
    if return_attn:
        out_shapes.append(jax.ShapeDtypeStruct((B, H, Lq, Lk), attn_dtype))
        out_specs.append(pl.BlockSpec((1, hg, tq, Lk), lambda b, g, i: (b, g, i, 0)))

    kernel = _make_sdpa_kernel(1.0 / float(temperature), hg, with_mask, return_attn)

    results = pl.pallas_call(
        kernel,
        out_shape=tuple(out_shapes),
        grid_spec=pltpu.PrefetchScalarGridSpec(
            num_scalar_prefetch=0,
            grid=grid,
            in_specs=in_specs,
            out_specs=out_specs,
        ),
        compiler_params=pltpu.CompilerParams(
            dimension_semantics=("parallel", "parallel", "parallel"),
        ),
    )(*inputs)

    out_flat = results[0]                       # (B, Lq, H*Dv), heads-major last dim
    attn = results[1] if return_attn else None
    if flat_output:
        return out_flat, attn
    out = out_flat.reshape(B, Lq, H, Dv).transpose(0, 2, 1, 3)     # (B, H, Lq, Dv)
    return out, attn


# ----------------------------------------------------------------------------
# MultiHeadAttention forward (attention core = Pallas kernel)
# ----------------------------------------------------------------------------
def init_mha_params(key, n_head, d_model, d_k, d_v, kv_dim=None):
    kv_dim = d_model if kv_dim is None else kv_dim
    k1, k2, k3, k4, k5, k6 = jax.random.split(key, 6)
    return {
        "w_qs": jax.random.normal(k1, (d_model, n_head * d_k), jnp.float32) / math.sqrt(d_model),
        "w_ks": jax.random.normal(k2, (kv_dim, n_head * d_k), jnp.float32) / math.sqrt(kv_dim),
        "w_vs": jax.random.normal(k3, (kv_dim, n_head * d_v), jnp.float32) / math.sqrt(kv_dim),
        "fc":   jax.random.normal(k4, (n_head * d_v, d_model), jnp.float32) / math.sqrt(n_head * d_v),
        "ln_g": 1.0 + 0.1 * jax.random.normal(k5, (d_model,), jnp.float32),
        "ln_b": 0.1 * jax.random.normal(k6, (d_model,), jnp.float32),
    }


def _layer_norm(x, gamma, beta, eps=1e-6):
    mu = jnp.mean(x, axis=-1, keepdims=True)
    var = jnp.mean(jnp.square(x - mu), axis=-1, keepdims=True)
    return (x - mu) * lax.rsqrt(var + eps) * gamma + beta


def multi_head_attention(params, q, k, v, n_head, d_k, d_v, mask=None, sum_flag=True):
    """Forward pass matching MultiHeadAttention.forward (inference; dropout is a no-op)."""
    B, Lq, _ = q.shape
    Bk, Lk, _ = k.shape
    residual = q
    # TODO(synk): the q/k/v/fc Linear layers and LayerNorm are plain dense/elementwise
    # ops left to XLA (already MXU/VPU mapped); the attention core below is Pallas.
    qh = (q @ params["w_qs"]).reshape(B, Lq, n_head, d_k).transpose(0, 2, 1, 3)
    kh = (k @ params["w_ks"]).reshape(Bk, Lk, n_head, d_k).transpose(0, 2, 1, 3)
    vh = (v @ params["w_vs"]).reshape(Bk, Lk, n_head, d_v).transpose(0, 2, 1, 3)

    # Pallas attention kernel; output comes back already in (B, Lq, n_head*d_v)
    # layout, so no transpose/contiguous is needed before the output projection.
    out_flat, attn = scaled_dot_product_attention(
        qh, kh, vh, temperature=d_k ** 0.5, mask=mask, flat_output=True)

    o = out_flat.astype(jnp.float32) @ params["fc"]
    if sum_flag:
        o = o + residual
        o = _layer_norm(o, params["ln_g"], params["ln_b"])
    return o, attn


# ----------------------------------------------------------------------------
# pure-JAX references (PyTorch semantics, all f32)
# ----------------------------------------------------------------------------
def _sdpa_reference(q, k, v, temperature, mask=None):
    attn = jnp.matmul(q / temperature, jnp.swapaxes(k, 2, 3))
    if mask is not None:
        attn = jnp.where(mask == 0, -1e9, attn)
    attn = jax.nn.softmax(attn, axis=-1)
    return jnp.matmul(attn, v), attn


def _mha_reference(params, q, k, v, n_head, d_k, d_v, mask=None, sum_flag=True):
    B, Lq, _ = q.shape
    Bk, Lk, _ = k.shape
    residual = q
    qh = (q @ params["w_qs"]).reshape(B, Lq, n_head, d_k).transpose(0, 2, 1, 3)
    kh = (k @ params["w_ks"]).reshape(Bk, Lk, n_head, d_k).transpose(0, 2, 1, 3)
    vh = (v @ params["w_vs"]).reshape(Bk, Lk, n_head, d_v).transpose(0, 2, 1, 3)
    m4 = None if mask is None else (mask[:, None] if mask.ndim == 3 else mask)
    o, attn = _sdpa_reference(qh, kh, vh, d_k ** 0.5, m4)
    o = o.transpose(0, 2, 1, 3).reshape(B, Lq, n_head * d_v) @ params["fc"]
    if sum_flag:
        o = o + residual
        o = _layer_norm(o, params["ln_g"], params["ln_b"])
    return o, attn


if __name__ == "__main__":
    # Small shapes consistent with the module: batch=2, seq=8, d_model=128,
    # n_head=4, d_k=d_v=32 (one head-group -> lane-dense 128-wide output block).
    B, L, d_model, n_head, d_k, d_v = 2, 8, 128, 4, 32, 32
    temperature = math.sqrt(d_k)

    key = jax.random.PRNGKey(0)
    kq, kk, kv, km, kx, kp = jax.random.split(key, 6)

    # ---- 1) ScaledDotProductAttention kernel vs. reference -----------------
    q4 = jax.random.normal(kq, (B, n_head, L, d_k), jnp.float32)
    k4 = jax.random.normal(kk, (B, n_head, L, d_k), jnp.float32)
    v4 = jax.random.normal(kv, (B, n_head, L, d_v), jnp.float32)
    mask = (jax.random.uniform(km, (B, 1, L, L)) > 0.2).astype(jnp.float32)

    out, attn = scaled_dot_product_attention(q4, k4, v4, temperature, mask=mask)
    out = jax.block_until_ready(out)
    attn = jax.block_until_ready(attn)
    out_ref, attn_ref = _sdpa_reference(q4, k4, v4, temperature, mask=mask)
    # tolerances sized for bf16 MXU inputs / bf16 attn writeback
    np.testing.assert_allclose(np.asarray(out), np.asarray(out_ref), rtol=5e-2, atol=5e-2)
    np.testing.assert_allclose(np.asarray(attn.astype(jnp.float32)), np.asarray(attn_ref),
                               rtol=5e-2, atol=5e-2)

    # mask=None path uses a dedicated kernel variant (no all-ones mask DMA)
    out2, attn2 = scaled_dot_product_attention(q4, k4, v4, temperature, mask=None)
    jax.block_until_ready(out2)
    out2_ref, attn2_ref = _sdpa_reference(q4, k4, v4, temperature, mask=None)
    np.testing.assert_allclose(np.asarray(out2), np.asarray(out2_ref), rtol=5e-2, atol=5e-2)
    np.testing.assert_allclose(np.asarray(attn2.astype(jnp.float32)), np.asarray(attn2_ref),
                               rtol=5e-2, atol=5e-2)

    # return_attn=False variant skips the O(Lq*Lk) attn writeback entirely
    out3, attn3 = scaled_dot_product_attention(q4, k4, v4, temperature, mask=mask,
                                               return_attn=False)
    jax.block_until_ready(out3)
    assert attn3 is None
    np.testing.assert_allclose(np.asarray(out3), np.asarray(out_ref), rtol=5e-2, atol=5e-2)

    # ---- 2) Full MultiHeadAttention forward ---------------------------------
    params = init_mha_params(kp, n_head, d_model, d_k, d_v)
    xq = jax.random.normal(kx, (B, L, d_model), jnp.float32)
    xk = xq
    xv = xq                                      # self-attention
    mask3 = mask[:, 0]                           # (B, Lq, Lk); module adds the head axis

    o, a = multi_head_attention(params, xq, xk, xv, n_head, d_k, d_v,
                                mask=mask3, sum_flag=True)
    o = jax.block_until_ready(o)
    a = jax.block_until_ready(a)
    o_ref, a_ref = _mha_reference(params, xq, xk, xv, n_head, d_k, d_v,
                                  mask=mask3, sum_flag=True)
    np.testing.assert_allclose(np.asarray(o), np.asarray(o_ref), rtol=7e-2, atol=7e-2)
    np.testing.assert_allclose(np.asarray(a.astype(jnp.float32)), np.asarray(a_ref),
                               rtol=5e-2, atol=5e-2)

    print("KERNEL_OK")
</pallas_src>

<mosaic_0001>
module attributes {stable_mosaic.version = 11 : i64} {
  func.func @kernel(%arg0: i32, %arg1: i32, %arg2: i32, %arg3: memref<1x4x8x32xbf16, #tpu.memory_space<vmem>>, %arg4: memref<1x4x8x32xbf16, #tpu.memory_space<vmem>>, %arg5: memref<1x4x8x32xbf16, #tpu.memory_space<vmem>>, %arg6: memref<1x8x8xf32, #tpu.memory_space<vmem>>, %arg7: memref<1x8x128xf32, #tpu.memory_space<vmem>>, %arg8: memref<1x4x8x8xbf16, #tpu.memory_space<vmem>>) attributes {dimension_semantics = [#tpu.dimension_semantics<parallel>, #tpu.dimension_semantics<parallel>, #tpu.dimension_semantics<parallel>], iteration_bounds = array<i64: 2, 1, 1>, scalar_prefetch = 0 : i64, scratch_operands = 0 : i64, tpu.core_type = #tpu.core_type<tc>, window_params = [{transform_indices = @transform_0, window_bounds = array<i64: 1, 4, 8, 32>}, {transform_indices = @transform_1, window_bounds = array<i64: 1, 4, 8, 32>}, {transform_indices = @transform_2, window_bounds = array<i64: 1, 4, 8, 32>}, {transform_indices = @transform_3, window_bounds = array<i64: 1, 8, 8>}, {transform_indices = @transform_4, window_bounds = array<i64: 1, 8, 128>}, {transform_indices = @transform_5, window_bounds = array<i64: 1, 4, 8, 8>}]} {
    %c0 = arith.constant 0 : index
    %c0_0 = arith.constant 0 : index
    %c0_1 = arith.constant 0 : index
    %c0_2 = arith.constant 0 : index
    %0 = vector.load %arg3[%c0, %c0_0, %c0_1, %c0_2] : memref<1x4x8x32xbf16, #tpu.memory_space<vmem>>, vector<1x4x8x32xbf16>
    %1 = vector.shape_cast %0 : vector<1x4x8x32xbf16> to vector<4x8x32xbf16>
    %cst = arith.constant 1.767580e-01 : bf16
    %2 = vector.broadcast %cst : bf16 to vector<4x8x32xbf16>
    %3 = arith.mulf %1, %2 : vector<4x8x32xbf16>
    %c0_3 = arith.constant 0 : index
    %c0_4 = arith.constant 0 : index
    %c0_5 = arith.constant 0 : index
    %c0_6 = arith.constant 0 : index
    %4 = vector.load %arg4[%c0_3, %c0_4, %c0_5, %c0_6] : memref<1x4x8x32xbf16, #tpu.memory_space<vmem>>, vector<1x4x8x32xbf16>
    %5 = vector.shape_cast %4 : vector<1x4x8x32xbf16> to vector<4x8x32xbf16>
    %c0_7 = arith.constant 0 : index
    %c0_8 = arith.constant 0 : index
    %c0_9 = arith.constant 0 : index
    %c0_10 = arith.constant 0 : index
    %6 = vector.load %arg5[%c0_7, %c0_8, %c0_9, %c0_10] : memref<1x4x8x32xbf16, #tpu.memory_space<vmem>>, vector<1x4x8x32xbf16>
    %7 = vector.shape_cast %6 : vector<1x4x8x32xbf16> to vector<4x8x32xbf16>
    %cst_11 = arith.constant dense<0.000000e+00> : vector<4x8x8xf32>
    %8 = tpu.matmul %3, %5, %cst_11 {dimension_numbers = #tpu.dot_dimension_numbers<[2], [2], [1], [1], [0, 0, 0, 1, 1, 1], [0], [0]>} : vector<4x8x32xbf16>, vector<4x8x32xbf16>, vector<4x8x8xf32> -> vector<4x8x8xf32>
    %c0_12 = arith.constant 0 : index
    %c0_13 = arith.constant 0 : index
    %c0_14 = arith.constant 0 : index
    %9 = vector.load %arg6[%c0_12, %c0_13, %c0_14] : memref<1x8x8xf32, #tpu.memory_space<vmem>>, vector<1x8x8xf32>
    %10 = vector.shape_cast %9 : vector<1x8x8xf32> to vector<8x8xf32>
    %11 = vector.shape_cast %10 : vector<8x8xf32> to vector<1x8x8xf32>
    %cst_15 = arith.constant 0.000000e+00 : f32
    %12 = vector.broadcast %cst_15 : f32 to vector<1x8x8xf32>
    %13 = arith.cmpf oeq, %11, %12 : vector<1x8x8xf32>
    %cst_16 = arith.constant -1.000000e+09 : f32
    %14 = vector.shape_cast %13 : vector<1x8x8xi1> to vector<1x8x8xi1>
    %15 = vector.broadcast %14 : vector<1x8x8xi1> to vector<4x8x8xi1>
    %16 = vector.broadcast %cst_16 : f32 to vector<4x8x8xf32>
    %17 = arith.select %15, %16, %8 : vector<4x8x8xi1>, vector<4x8x8xf32>
    %cst_17 = arith.constant dense<0xFF800000> : vector<4x8xf32>
    %18 = vector.multi_reduction <maximumf>, %17, %cst_17 [2] : vector<4x8x8xf32> to vector<4x8xf32>
    %19 = vector.shape_cast %18 : vector<4x8xf32> to vector<4x8x1xf32>
    %20 = vector.broadcast %19 : vector<4x8x1xf32> to vector<4x8x8xf32>
    %21 = arith.subf %17, %20 : vector<4x8x8xf32>
    %22 = math.exp %21 : vector<4x8x8xf32>
    %cst_18 = arith.constant dense<0.000000e+00> : vector<4x8xf32>
    %23 = vector.multi_reduction <add>, %22, %cst_18 [2] : vector<4x8x8xf32> to vector<4x8xf32>
    %24 = vector.shape_cast %23 : vector<4x8xf32> to vector<4x8x1xf32>
    %25 = tpu.reciprocal %24 {approx = true} : vector<4x8x1xf32> -> vector<4x8x1xf32>
    %26 = vector.broadcast %25 : vector<4x8x1xf32> to vector<4x8x8xf32>
    %27 = arith.mulf %22, %26 : vector<4x8x8xf32>
    %28 = arith.truncf %27 : vector<4x8x8xf32> to vector<4x8x8xbf16>
    %29 = vector.extract_strided_slice %28 {offsets = [0, 0, 0], sizes = [1, 8, 8], strides = [1, 1, 1]} : vector<4x8x8xbf16> to vector<1x8x8xbf16>
    %30 = vector.shape_cast %29 : vector<1x8x8xbf16> to vector<8x8xbf16>
    %31 = vector.extract_strided_slice %7 {offsets = [0, 0, 0], sizes = [1, 8, 32], strides = [1, 1, 1]} : vector<4x8x32xbf16> to vector<1x8x32xbf16>
    %32 = vector.shape_cast %31 : vector<1x8x32xbf16> to vector<8x32xbf16>
    %cst_19 = arith.constant dense<0.000000e+00> : vector<8x32xf32>
    %33 = tpu.matmul %30, %32, %cst_19 {dimension_numbers = #tpu.dot_dimension_numbers<[1], [0], [0], [1], [0, 0, 1, 1], [], []>} : vector<8x8xbf16>, vector<8x32xbf16>, vector<8x32xf32> -> vector<8x32xf32>
    %34 = vector.extract_strided_slice %28 {offsets = [1, 0, 0], sizes = [1, 8, 8], strides = [1, 1, 1]} : vector<4x8x8xbf16> to vector<1x8x8xbf16>
    %35 = vector.shape_cast %34 : vector<1x8x8xbf16> to vector<8x8xbf16>
    %36 = vector.extract_strided_slice %7 {offsets = [1, 0, 0], sizes = [1, 8, 32], strides = [1, 1, 1]} : vector<4x8x32xbf16> to vector<1x8x32xbf16>
    %37 = vector.shape_cast %36 : vector<1x8x32xbf16> to vector<8x32xbf16>
    %cst_20 = arith.constant dense<0.000000e+00> : vector<8x32xf32>
    %38 = tpu.matmul %35, %37, %cst_20 {dimension_numbers = #tpu.dot_dimension_numbers<[1], [0], [0], [1], [0, 0, 1, 1], [], []>} : vector<8x8xbf16>, vector<8x32xbf16>, vector<8x32xf32> -> vector<8x32xf32>
    %39 = vector.extract_strided_slice %28 {offsets = [2, 0, 0], sizes = [1, 8, 8], strides = [1, 1, 1]} : vector<4x8x8xbf16> to vector<1x8x8xbf16>
    %40 = vector.shape_cast %39 : vector<1x8x8xbf16> to vector<8x8xbf16>
    %41 = vector.extract_strided_slice %7 {offsets = [2, 0, 0], sizes = [1, 8, 32], strides = [1, 1, 1]} : vector<4x8x32xbf16> to vector<1x8x32xbf16>
    %42 = vector.shape_cast %41 : vector<1x8x32xbf16> to vector<8x32xbf16>
    %cst_21 = arith.constant dense<0.000000e+00> : vector<8x32xf32>
    %43 = tpu.matmul %40, %42, %cst_21 {dimension_numbers = #tpu.dot_dimension_numbers<[1], [0], [0], [1], [0, 0, 1, 1], [], []>} : vector<8x8xbf16>, vector<8x32xbf16>, vector<8x32xf32> -> vector<8x32xf32>
    %44 = vector.extract_strided_slice %28 {offsets = [3, 0, 0], sizes = [1, 8, 8], strides = [1, 1, 1]} : vector<4x8x8xbf16> to vector<1x8x8xbf16>
    %45 = vector.shape_cast %44 : vector<1x8x8xbf16> to vector<8x8xbf16>
    %46 = vector.extract_strided_slice %7 {offsets = [3, 0, 0], sizes = [1, 8, 32], strides = [1, 1, 1]} : vector<4x8x32xbf16> to vector<1x8x32xbf16>
    %47 = vector.shape_cast %46 : vector<1x8x32xbf16> to vector<8x32xbf16>
    %cst_22 = arith.constant dense<0.000000e+00> : vector<8x32xf32>
    %48 = tpu.matmul %45, %47, %cst_22 {dimension_numbers = #tpu.dot_dimension_numbers<[1], [0], [0], [1], [0, 0, 1, 1], [], []>} : vector<8x8xbf16>, vector<8x32xbf16>, vector<8x32xf32> -> vector<8x32xf32>
    %49 = tpu.concatenate %33, %38, %43, %48 in 1 : vector<8x32xf32>, vector<8x32xf32>, vector<8x32xf32>, vector<8x32xf32> -> vector<8x128xf32>
    %c0_23 = arith.constant 0 : index
    %c0_24 = arith.constant 0 : index
    %c0_25 = arith.constant 0 : index
    %50 = vector.load %arg7[%c0_23, %c0_24, %c0_25] : memref<1x8x128xf32, #tpu.memory_space<vmem>>, vector<1x8x128xf32>
    %51 = vector.shape_cast %50 : vector<1x8x128xf32> to vector<8x128xf32>
    %52 = vector.shape_cast %49 : vector<8x128xf32> to vector<1x8x128xf32>
    tpu.vector_store %arg7[%c0_23, %c0_24, %c0_25], %52 {strides = array<i32>} : memref<1x8x128xf32, #tpu.memory_space<vmem>>, vector<1x8x128xf32>,
    %53 = arith.truncf %27 : vector<4x8x8xf32> to vector<4x8x8xbf16>
    %c0_26 = arith.constant 0 : index
    %c0_27 = arith.constant 0 : index
    %c0_28 = arith.constant 0 : index
    %c0_29 = arith.constant 0 : index
    %54 = vector.load %arg8[%c0_26, %c0_27, %c0_28, %c0_29] : memref<1x4x8x8xbf16, #tpu.memory_space<vmem>>, vector<1x4x8x8xbf16>
    %55 = vector.shape_cast %54 : vector<1x4x8x8xbf16> to vector<4x8x8xbf16>
    %56 = vector.shape_cast %53 : vector<4x8x8xbf16> to vector<1x4x8x8xbf16>
    tpu.vector_store %arg8[%c0_26, %c0_27, %c0_28, %c0_29], %56 {strides = array<i32>} : memref<1x4x8x8xbf16, #tpu.memory_space<vmem>>, vector<1x4x8x8xbf16>,
    return
  }
  func.func @transform_0(%arg0: i32, %arg1: i32, %arg2: i32) -> (i32, i32, i32, i32) {
    %c0_i32 = arith.constant 0 : i32
    %c0_i32_0 = arith.constant 0 : i32
    return %arg0, %arg1, %arg2, %c0_i32 : i32, i32, i32, i32
  }
  func.func @transform_1(%arg0: i32, %arg1: i32, %arg2: i32) -> (i32, i32, i32, i32) {
    %c0_i32 = arith.constant 0 : i32
    %c0_i32_0 = arith.constant 0 : i32
    %c0_i32_1 = arith.constant 0 : i32
    return %arg0, %arg1, %c0_i32, %c0_i32_0 : i32, i32, i32, i32
  }
  func.func @transform_2(%arg0: i32, %arg1: i32, %arg2: i32) -> (i32, i32, i32, i32) {
    %c0_i32 = arith.constant 0 : i32
    %c0_i32_0 = arith.constant 0 : i32
    %c0_i32_1 = arith.constant 0 : i32
    return %arg0, %arg1, %c0_i32, %c0_i32_0 : i32, i32, i32, i32
  }
  func.func @transform_3(%arg0: i32, %arg1: i32, %arg2: i32) -> (i32, i32, i32) {
    %c0_i32 = arith.constant 0 : i32
    %c0_i32_0 = arith.constant 0 : i32
    return %arg0, %arg2, %c0_i32 : i32, i32, i32
  }
  func.func @transform_4(%arg0: i32, %arg1: i32, %arg2: i32) -> (i32, i32, i32) {
    %c0_i32 = arith.constant 0 : i32
    return %arg0, %arg2, %arg1 : i32, i32, i32
  }
  func.func @transform_5(%arg0: i32, %arg1: i32, %arg2: i32) -> (i32, i32, i32, i32) {
    %c0_i32 = arith.constant 0 : i32
    %c0_i32_0 = arith.constant 0 : i32
    return %arg0, %arg1, %arg2, %c0_i32 : i32, i32, i32, i32
  }
}

</mosaic_0001>

<llo_original>
// kernel: tpu_custom_call.1
$region0: #{tpu_custom_call.1}
  #allocation0 [shape = 'u32[]', space=smem, size = 0x4, offset = 0x4, fixed_abs, tag = 'smem constant byte address 0x4 - core index']
  #allocation1 [shape = 'u32[144,128]{1,0:T(1,128)}', space=vmem, size = 0x12000, scoped, tag = 'internal scratch']
  %s0 = inlined_call_operand.hbm [shape: bf16[2,4,8,32], index: 0, kind: input, shape index: {}]
  %s1 = inlined_call_operand.hbm [shape: bf16[2,4,8,32], index: 1, kind: input, shape index: {}]
  %s2 = inlined_call_operand.hbm [shape: bf16[2,4,8,32], index: 2, kind: input, shape index: {}]
  %s3 = inlined_call_operand.hbm [shape: f32[2,8,8], index: 3, kind: input, shape index: {}]
  %s4 = inlined_call_operand.hbm [shape: f32[2,8,128], index: 4, kind: output, shape index: {0}]
  %s5 = inlined_call_operand.hbm [shape: bf16[2,4,8,8], index: 5, kind: output, shape index: {1}]
  %6 = xla_tuple %s4, %s5
  %s7 = sld [smem:[#allocation0]]
  $region73: #{tpu_custom_call.1} parent=0
    _
  %s9 = ssub.s32 1, %s7
  %s10 = scalar_select 0, %s9, %s7
  $region1: #{tpu_custom_call.1} parent=0
    #allocation2 [shape = 'u8[16384]{0}', space=vmem, size = 0x4000, scoped, tag = 'input window, operand 0']
    #allocation3 [shape = 's32[2]{0}', space=sflag, size = 0x8, scoped, tag = 'scoped memory for tpu_custom_call.1']
    #allocation4 [shape = 's32[2]{0}', space=sflag, size = 0x8, scoped, tag = 'scoped memory for tpu_custom_call.1']
    #allocation5 [shape = 'u8[16384]{0}', space=vmem, size = 0x4000, scoped, tag = 'input window, operand 1']
    #allocation6 [shape = 's32[2]{0}', space=sflag, size = 0x8, scoped, tag = 'scoped memory for tpu_custom_call.1']
    #allocation7 [shape = 'u8[16384]{0}', space=vmem, size = 0x4000, scoped, tag = 'input window, operand 2']
    #allocation8 [shape = 'u8[8192]{0}', space=vmem, size = 0x2000, scoped, tag = 'input window, operand 3']
    #allocation9 [shape = 's32[2]{0}', space=sflag, size = 0x8, scoped, tag = 'scoped memory for tpu_custom_call.1']
    #allocation10 [shape = 'u8[8192]{0}', space=vmem, size = 0x2000, scoped, tag = 'output window, operand 0']
    #allocation11 [shape = 'u8[16384]{0}', space=vmem, size = 0x4000, scoped, tag = 'output window, operand 1']
    #allocation12 [shape = 's32[2]{0}', space=sflag, size = 0x8, scoped, tag = 'scoped memory for tpu_custom_call.1']
    %11 = vsyncpa [#allocation3], 0
    %s12 = scalar_lea.sflag [#allocation3], 1
    %13 = vsyncpa %s12, 0
    %14 = vsyncpa [#allocation6], 0
    %s15 = scalar_lea.sflag [#allocation6], 1
    %16 = vsyncpa %s15, 0
    %17 = vsyncpa [#allocation9], 0
    %s18 = scalar_lea.sflag [#allocation9], 1
    %19 = vsyncpa %s18, 0
    %20 = vsyncpa [#allocation4], 0
    %s21 = scalar_lea.sflag [#allocation4], 1
    %22 = vsyncpa %s21, 0
    %23 = vsyncpa [#allocation12], 0
    %s24 = scalar_lea.sflag [#allocation12], 1
    %25 = vsyncpa %s24, 0
    loop: start=0, step=1, limit=4
    $region2: #{tpu_custom_call.1} parent=1 // loop_pre_header
      _
    $region3: #{tpu_custom_call.1} parent=1 // loop_header
      %s27 = sphi 0, %s31
      %p28 = scmp.ge.s32.totalorder %s27, 4
      %s34 = sphi 0, %s53
      %s35 = sphi 0, %s49
      %s36 = sphi 0, %s45
      %s37 = sphi 0, %s34
      %s38 = sphi 0, %s35
      %s39 = sphi 0, %s36
      %s40 = sphi 0, %s37
      %s41 = sphi 0, %s38
      %s42 = sphi 0, %s39
      %s60 = sphi 0, %s62
      %s63 = sphi 0, %s60
      %s64 = sphi 0, %s63
      %s80 = sphi 0, %s64
      %s88 = sphi 0, %s90
      %s91 = sphi 0, %s88
      %s92 = sphi 0, %s91
      %s108 = sphi 0, %s92
      %s116 = sphi 0, %s118
      %s119 = sphi 0, %s116
      %s120 = sphi 0, %s119
      %s136 = sphi 0, %s120
      %s144 = sphi 0, %s146
      %s147 = sphi 0, %s144
      %s148 = sphi 0, %s147
      %s164 = sphi 0, %s148
      %s174 = sphi 0, %s176
      %s177 = sphi 0, %s174
      %s178 = sphi 0, %s177
      %s194 = sphi 0, %s178
      %s204 = sphi 0, %s206
      %s207 = sphi 0, %s204
      %s208 = sphi 0, %s207
      %s224 = sphi 0, %s208
    $region4: #{tpu_custom_call.1} parent=1 // loop_header_branch
      %30 = sbr.rel (%p28) target = $region8
    $region5: #{tpu_custom_call.1} parent=1 // loop_body
      %s32 = ssub.s32 %s27, 1
      %s33 = ssub.s32 %s27, 2
      %s43 = sadd.s32 1, %s36
      %p44 = scmp.ge.s32.totalorder %s43, 1
      %s45 = scalar_select %p44, 0, %s43
      %s46 = sadd.s32 1, %s35
      %s47 = scalar_select %p44, %s46, %s35
      %p48 = scmp.ge.s32.totalorder %s47, 1
      %s49 = scalar_select %p48, 0, %s47
      %s50 = sadd.s32 1, %s34
      %s51 = scalar_select %p48, %s50, %s34
      %p52 = scmp.ge.s32.totalorder %s51, 2
      %s53 = scalar_select %p52, 0, %s51
      %s54 = ssub.s32 %s34, %s53
      %s55 = ssub.s32 %s35, %s49
      %s56 = sor.u32 %s54, %s55
      %s57 = ssub.s32 %s36, %s45
      %s58 = sor.u32 %s56, %s57
      %p59 = scmp.eq.s32.totalorder %s58, 0
      %s61 = sadd.s32 %s60, 1
      %s62 = scalar_select %p59, %s60, %s61
      %p65 = pneg %p59
      %p66 = scmp.eq.s32.totalorder %s27, 1
      %p67 = por %p65, %p66
      %p68 = scmp.ne.s32.totalorder %s60, %s63
      %p69 = scmp.eq.s32.totalorder %s27, 0
      %p70 = por %p68, %p69
      %p71 = scmp.ne.s32.totalorder %s60, %s63
      %p72 = scmp.eq.s32.totalorder %s32, 1
      %p73 = por %p71, %p72
      %p74 = scmp.ne.s32.totalorder %s63, %s64
      %p75 = scmp.eq.s32.totalorder %s32, 0
      %p76 = por %p74, %p75
      %p77 = scmp.ne.s32.totalorder %s63, %s64
      %p78 = scmp.eq.s32.totalorder %s33, 1
      %p79 = por %p77, %p78
      %p81 = scmp.ne.s32.totalorder %s64, %s80
      %p82 = scmp.eq.s32.totalorder %s33, 0
      %p83 = por %p81, %p82
      %s84 = ssub.s32 %s34, %s53
      %s85 = ssub.s32 %s35, %s49
      %s86 = sor.u32 %s84, %s85
      %p87 = scmp.eq.s32.totalorder %s86, 0
      %s89 = sadd.s32 %s88, 1
      %s90 = scalar_select %p87, %s88, %s89
      %p93 = pneg %p87
      %p94 = scmp.eq.s32.totalorder %s27, 1
      %p95 = por %p93, %p94
      %p96 = scmp.ne.s32.totalorder %s88, %s91
      %p97 = scmp.eq.s32.totalorder %s27, 0
      %p98 = por %p96, %p97
      %p99 = scmp.ne.s32.totalorder %s88, %s91
      %p100 = scmp.eq.s32.totalorder %s32, 1
      %p101 = por %p99, %p100
      %p102 = scmp.ne.s32.totalorder %s91, %s92
      %p103 = scmp.eq.s32.totalorder %s32, 0
      %p104 = por %p102, %p103
      %p105 = scmp.ne.s32.totalorder %s91, %s92
      %p106 = scmp.eq.s32.totalorder %s33, 1
      %p107 = por %p105, %p106
      %p109 = scmp.ne.s32.totalorder %s92, %s108
      %p110 = scmp.eq.s32.totalorder %s33, 0
      %p111 = por %p109, %p110
      %s112 = ssub.s32 %s34, %s53
      %s113 = ssub.s32 %s35, %s49
      %s114 = sor.u32 %s112, %s113
      %p115 = scmp.eq.s32.totalorder %s114, 0
      %s117 = sadd.s32 %s116, 1
      %s118 = scalar_select %p115, %s116, %s117
      %p121 = pneg %p115
      %p122 = scmp.eq.s32.totalorder %s27, 1
      %p123 = por %p121, %p122
      %p124 = scmp.ne.s32.totalorder %s116, %s119
      %p125 = scmp.eq.s32.totalorder %s27, 0
      %p126 = por %p124, %p125
      %p127 = scmp.ne.s32.totalorder %s116, %s119
      %p128 = scmp.eq.s32.totalorder %s32, 1
      %p129 = por %p127, %p128
      %p130 = scmp.ne.s32.totalorder %s119, %s120
      %p131 = scmp.eq.s32.totalorder %s32, 0
      %p132 = por %p130, %p131
      %p133 = scmp.ne.s32.totalorder %s119, %s120
      %p134 = scmp.eq.s32.totalorder %s33, 1
      %p135 = por %p133, %p134
      %p137 = scmp.ne.s32.totalorder %s120, %s136
      %p138 = scmp.eq.s32.totalorder %s33, 0
      %p139 = por %p137, %p138
      %s140 = ssub.s32 %s34, %s53
      %s141 = ssub.s32 %s36, %s45
      %s142 = sor.u32 %s140, %s141
      %p143 = scmp.eq.s32.totalorder %s142, 0
      %s145 = sadd.s32 %s144, 1
      %s146 = scalar_select %p143, %s144, %s145
      %p149 = pneg %p143
      %p150 = scmp.eq.s32.totalorder %s27, 1
      %p151 = por %p149, %p150
      %p152 = scmp.ne.s32.totalorder %s144, %s147
      %p153 = scmp.eq.s32.totalorder %s27, 0
      %p154 = por %p152, %p153
      %p155 = scmp.ne.s32.totalorder %s144, %s147
      %p156 = scmp.eq.s32.totalorder %s32, 1
      %p157 = por %p155, %p156
      %p158 = scmp.ne.s32.totalorder %s147, %s148
      %p159 = scmp.eq.s32.totalorder %s32, 0
      %p160 = por %p158, %p159
      %p161 = scmp.ne.s32.totalorder %s147, %s148
      %p162 = scmp.eq.s32.totalorder %s33, 1
      %p163 = por %p161, %p162
      %p165 = scmp.ne.s32.totalorder %s148, %s164
      %p166 = scmp.eq.s32.totalorder %s33, 0
      %p167 = por %p165, %p166
      %s168 = ssub.s32 %s34, %s53
      %s169 = ssub.s32 %s36, %s45
      %s170 = sor.u32 %s168, %s169
      %s171 = ssub.s32 %s35, %s49
      %s172 = sor.u32 %s170, %s171
      %p173 = scmp.eq.s32.totalorder %s172, 0
      %s175 = sadd.s32 %s174, 1
      %s176 = scalar_select %p173, %s174, %s175
      %p179 = pneg %p173
      %p180 = scmp.eq.s32.totalorder %s27, 1
      %p181 = por %p179, %p180
      %p182 = scmp.ne.s32.totalorder %s174, %s177
      %p183 = scmp.eq.s32.totalorder %s27, 0
      %p184 = por %p182, %p183
      %p185 = scmp.ne.s32.totalorder %s174, %s177
      %p186 = scmp.eq.s32.totalorder %s32, 1
      %p187 = por %p185, %p186
      %p188 = scmp.ne.s32.totalorder %s177, %s178
      %p189 = scmp.eq.s32.totalorder %s32, 0
      %p190 = por %p188, %p189
      %p191 = scmp.ne.s32.totalorder %s177, %s178
      %p192 = scmp.eq.s32.totalorder %s33, 1
      %p193 = por %p191, %p192
      %p195 = scmp.ne.s32.totalorder %s178, %s194
      %p196 = scmp.eq.s32.totalorder %s33, 0
      %p197 = por %p195, %p196
      %s198 = ssub.s32 %s34, %s53
      %s199 = ssub.s32 %s35, %s49
      %s200 = sor.u32 %s198, %s199
      %s201 = ssub.s32 %s36, %s45
      %s202 = sor.u32 %s200, %s201
      %p203 = scmp.eq.s32.totalorder %s202, 0
      %s205 = sadd.s32 %s204, 1
      %s206 = scalar_select %p203, %s204, %s205
      %p209 = pneg %p203
      %p210 = scmp.eq.s32.totalorder %s27, 1
      %p211 = por %p209, %p210
      %p212 = scmp.ne.s32.totalorder %s204, %s207
      %p213 = scmp.eq.s32.totalorder %s27, 0
      %p214 = por %p212, %p213
      %p215 = scmp.ne.s32.totalorder %s204, %s207
      %p216 = scmp.eq.s32.totalorder %s32, 1
      %p217 = por %p215, %p216
      %p218 = scmp.ne.s32.totalorder %s207, %s208
      %p219 = scmp.eq.s32.totalorder %s32, 0
      %p220 = por %p218, %p219
      %p221 = scmp.ne.s32.totalorder %s207, %s208
      %p222 = scmp.eq.s32.totalorder %s33, 1
      %p223 = por %p221, %p222
      %p225 = scmp.ne.s32.totalorder %s208, %s224
      %p226 = scmp.eq.s32.totalorder %s33, 0
      %p227 = por %p225, %p226
      %p228 = scmp.le.s32.totalorder 1, %s27
      %p229 = scmp.lt.s32.totalorder %s27, 3
      %p230 = pnand %p228, %p229
      %p231 = pneg %p230
      // Predicated region
      $region9: #{tpu_custom_call.1} parent=5 // pred_check
        _
      $region10: #{tpu_custom_call.1} parent=5 // pred_check_branch
        %233 = sbr.rel (%p230) target = $region12
      $region11: #{tpu_custom_call.1} parent=5 // pred_region
        %s234 = ssub.s32 %s27, 1
      $region12: #{tpu_custom_call.1} parent=5 // pred_fallthru
        _
      %p235 = scmp.lt.s32.totalorder %s27, 2
      // Predicated region
      $region13: #{tpu_custom_call.1} parent=5 // pred_check
        %p236 = pneg %p235
      $region14: #{tpu_custom_call.1} parent=5 // pred_check_branch
        %238 = sbr.rel (%p236) target = $region16
      $region15: #{tpu_custom_call.1} parent=5 // pred_region
        // Predicated region
        $region17: #{tpu_custom_call.1} parent=15 // pred_check
          %p239 = pneg %p70
        $region18: #{tpu_custom_call.1} parent=15 // pred_check_branch
          %241 = sbr.rel (%p239) target = $region20
        $region19: #{tpu_custom_call.1} parent=15 // pred_region
          %s242 = sand.u32 %s60, 1
          %s243 = scalar_lea.sflag [#allocation3], %s242
          %s244 = sand.u32 %s60, 1
          %s245 = smul.addr %s244, 16
          %s246 = scalar_lea.vmem [#allocation2], %s245
          %s247 = smul.u32 4, %s35
          %s249 = ssub.s32 256, 256
          %250 = vsyncadd %s243, %s249
          %s251 = sadd.s32 %s36, %s247
          %s252 = smul.addr %s34, 4
          %s253 = sadd.s32 %s251, %s252
          %s254 = smul.addr %s253, 64
          %s255 = scalar_lea.hbm %s0, %s254
          %s256 = sshll.u32 %s246, 4
          %s257 = int_to_ptr.vmem [resolvable:$true] %s256
          %262 = dma.hbm_to_vmem [thread:$0]  %s255, 256, %s257, %s243, 64, 64, 4
        $region20: #{tpu_custom_call.1} parent=15 // pred_fallthru
          _
        // Predicated region
        $region21: #{tpu_custom_call.1} parent=15 // pred_check
          %p263 = pneg %p98
        $region22: #{tpu_custom_call.1} parent=15 // pred_check_branch
          %265 = sbr.rel (%p263) target = $region24
        $region23: #{tpu_custom_call.1} parent=15 // pred_region
          %s266 = sand.u32 %s27, 1
          %s267 = scalar_lea.sflag [#allocation6], %s266
          %s268 = sand.u32 %s88, 1
          %s269 = smul.addr %s268, 16
          %s270 = scalar_lea.vmem [#allocation5], %s269
          %s271 = smul.u32 4, %s35
          %s273 = ssub.s32 256, 256
          %274 = vsyncadd %s267, %s273
          %s275 = smul.addr %s34, 4
          %s276 = sadd.s32 %s271, %s275
          %s277 = smul.addr %s276, 64
          %s278 = scalar_lea.hbm %s1, %s277
          %s279 = sshll.u32 %s270, 4
          %s280 = int_to_ptr.vmem [resolvable:$true] %s279
          %285 = dma.hbm_to_vmem [thread:$0]  %s278, 256, %s280, %s267, 64, 64, 4
        $region24: #{tpu_custom_call.1} parent=15 // pred_fallthru
          _
        // Predicated region
        $region25: #{tpu_custom_call.1} parent=15 // pred_check
          %p286 = pneg %p126
        $region26: #{tpu_custom_call.1} parent=15 // pred_check_branch
          %288 = sbr.rel (%p286) target = $region28
        $region27: #{tpu_custom_call.1} parent=15 // pred_region
          %s289 = sand.u32 %s27, 1
          %s290 = scalar_lea.sflag [#allocation6], %s289
          %s291 = sand.u32 %s116, 1
          %s292 = smul.addr %s291, 16
          %s293 = scalar_lea.vmem [#allocation7], %s292
          %s294 = smul.u32 4, %s35
          %s296 = ssub.s32 256, 256
          %297 = vsyncadd %s290, %s296
          %s298 = smul.addr %s34, 4
          %s299 = sadd.s32 %s294, %s298
          %s300 = smul.addr %s299, 64
          %s301 = scalar_lea.hbm %s2, %s300
          %s302 = sshll.u32 %s293, 4
          %s303 = int_to_ptr.vmem [resolvable:$true] %s302
          %308 = dma.hbm_to_vmem [thread:$0]  %s301, 256, %s303, %s290, 64, 64, 4
        $region28: #{tpu_custom_call.1} parent=15 // pred_fallthru
          _
        // Predicated region
        $region29: #{tpu_custom_call.1} parent=15 // pred_check
          %p309 = pneg %p154
        $region30: #{tpu_custom_call.1} parent=15 // pred_check_branch
          %311 = sbr.rel (%p309) target = $region32
        $region31: #{tpu_custom_call.1} parent=15 // pred_region
          %s312 = sand.u32 %s144, 1
          %s313 = scalar_lea.sflag [#allocation9], %s312
          %s314 = sand.u32 %s144, 1
          %s315 = smul.addr %s314, 8
          %s316 = scalar_lea.vmem [#allocation8], %s315
          %s318 = ssub.s32 128, 128
          %319 = vsyncadd %s313, %s318
          %s320 = sadd.s32 %s36, %s34
          %s321 = smul.addr %s320, 128
          %s322 = scalar_lea.hbm %s3, %s321
          %s324 = sshll.u32 %s316, 4
          %s325 = int_to_ptr.vmem [resolvable:$true] %s324
          %327 = dma.hbm_to_vmem [thread:$0]  %s322, 128, %s325, %s313
        $region32: #{tpu_custom_call.1} parent=15 // pred_fallthru
          _
      $region16: #{tpu_custom_call.1} parent=5 // pred_fallthru
        _
      %p328 = scmp.le.s32.totalorder 1, %s27
      %p329 = scmp.lt.s32.totalorder %s27, 3
      %p330 = pnand %p328, %p329
      %p331 = pneg %p330
      // Predicated region
      $region33: #{tpu_custom_call.1} parent=5 // pred_check
        _
      $region34: #{tpu_custom_call.1} parent=5 // pred_check_branch
        %333 = sbr.rel (%p330) target = $region36
      $region35: #{tpu_custom_call.1} parent=5 // pred_region
        %s334 = ssub.s32 %s27, 1
        %s335 = sand.u32 %s63, 1
        %s336 = scalar_lea.sflag [#allocation3], %s335
        %s337 = sand.u32 %s63, 1
        %s338 = smul.addr %s337, 16
        %s339 = scalar_lea.vmem [#allocation2], %s338
        // Predicated region
        $region37: #{tpu_custom_call.1} parent=35 // pred_check
          %p340 = pneg %p76
        $region38: #{tpu_custom_call.1} parent=35 // pred_check_branch
          %342 = sbr.rel (%p340) target = $region40
        $region39: #{tpu_custom_call.1} parent=35 // pred_region
          %343 = dma.done %s336, 256
        $region40: #{tpu_custom_call.1} parent=35 // pred_fallthru
          _
        %s344 = sand.u32 %s32, 1
        %s345 = scalar_lea.sflag [#allocation6], %s344
        %s346 = sand.u32 %s91, 1
        %s347 = smul.addr %s346, 16
        %s348 = scalar_lea.vmem [#allocation5], %s347
        // Predicated region
        $region41: #{tpu_custom_call.1} parent=35 // pred_check
          %p349 = pneg %p104
        $region42: #{tpu_custom_call.1} parent=35 // pred_check_branch
          %351 = sbr.rel (%p349) target = $region44
        $region43: #{tpu_custom_call.1} parent=35 // pred_region
          %352 = dma.done %s345, 256
        $region44: #{tpu_custom_call.1} parent=35 // pred_fallthru
          _
        %s353 = sand.u32 %s32, 1
        %s354 = scalar_lea.sflag [#allocation6], %s353
        %s355 = sand.u32 %s119, 1
        %s356 = smul.addr %s355, 16
        %s357 = scalar_lea.vmem [#allocation7], %s356
        // Predicated region
        $region45: #{tpu_custom_call.1} parent=35 // pred_check
          %p358 = pneg %p132
        $region46: #{tpu_custom_call.1} parent=35 // pred_check_branch
          %360 = sbr.rel (%p358) target = $region48
        $region47: #{tpu_custom_call.1} parent=35 // pred_region
          %361 = dma.done %s354, 256
        $region48: #{tpu_custom_call.1} parent=35 // pred_fallthru
          _
        %s362 = sand.u32 %s147, 1
        %s363 = scalar_lea.sflag [#allocation9], %s362
        %s364 = sand.u32 %s147, 1
        %s365 = smul.addr %s364, 8
        %s366 = scalar_lea.vmem [#allocation8], %s365
        // Predicated region
        $region49: #{tpu_custom_call.1} parent=35 // pred_check
          %p367 = pneg %p160
        $region50: #{tpu_custom_call.1} parent=35 // pred_check_branch
          %369 = sbr.rel (%p367) target = $region52
        $region51: #{tpu_custom_call.1} parent=35 // pred_region
          %370 = dma.done %s363, 128
        $region52: #{tpu_custom_call.1} parent=35 // pred_fallthru
          _
        %s371 = sand.u32 %s63, 1
        %s372 = scalar_lea.sflag [#allocation3], %s371
        %s373 = sand.u32 %s63, 1
        %s374 = smul.addr %s373, 16
        %s375 = scalar_lea.vmem [#allocation2], %s374
        %p376 = pneg %p76
        %p377 = pneg %p73
        %s378 = sand.u32 %s32, 1
        %s379 = scalar_lea.sflag [#allocation6], %s378
        %s380 = sand.u32 %s91, 1
        %s381 = smul.addr %s380, 16
        %s382 = scalar_lea.vmem [#allocation5], %s381
        %p383 = pneg %p104
        %p384 = pneg %p101
        %s385 = sand.u32 %s32, 1
        %s386 = scalar_lea.sflag [#allocation6], %s385
        %s387 = sand.u32 %s119, 1
        %s388 = smul.addr %s387, 16
        %s389 = scalar_lea.vmem [#allocation7], %s388
        %p390 = pneg %p132
        %p391 = pneg %p129
        %s392 = sand.u32 %s147, 1
        %s393 = scalar_lea.sflag [#allocation9], %s392
        %s394 = sand.u32 %s147, 1
        %s395 = smul.addr %s394, 8
        %s396 = scalar_lea.vmem [#allocation8], %s395
        %p397 = pneg %p160
        %p398 = pneg %p157
        %p399 = pneg %p190
        %p400 = pneg %p187
        %s401 = sand.u32 %s177, 1
        %s402 = scalar_lea.sflag [#allocation4], %s401
        %s403 = sand.u32 %s177, 1
        %s404 = smul.addr %s403, 8
        %s405 = scalar_lea.vmem [#allocation10], %s404
        %p406 = pneg %p220
        %p407 = pneg %p217
        %s408 = sand.u32 %s207, 1
        %s409 = scalar_lea.sflag [#allocation12], %s408
        %s410 = sand.u32 %s207, 1
        %s411 = smul.addr %s410, 16
        %s412 = scalar_lea.vmem [#allocation11], %s411
        %s413 = smul.u32 4, %s38
        %s414 = smul.u32 4, %s38
        %s415 = smul.u32 4, %s38
        %s416 = smul.u32 4, %s38
        %v419 = vld [vmem:[%s339] sm:$0xf]
        %v420 = vld [vmem:[%s339 + $0x4] sm:$0xf]
        %v421 = vld [vmem:[%s339 + $0x8] sm:$0xf]
        %v422 = vld [vmem:[%s339 + $0xc] sm:$0xf]
        %v423 = vmul.bf16 %v419, 1043676725
        %v424 = vmul.bf16 %v420, 1043676725
        %v425 = vmul.bf16 %v421, 1043676725
        %v426 = vmul.bf16 %v422, 1043676725
        %v427 = vld [vmem:[%s348] sm:$0xf]
        %v428 = vld [vmem:[%s348 + $0x4] sm:$0xf]
        %v429 = vld [vmem:[%s348 + $0x8] sm:$0xf]
        %v430 = vld [vmem:[%s348 + $0xc] sm:$0xf]
        %v431 = vld [vmem:[%s357] sm:$0xf]
        %v432 = vld [vmem:[%s357 + $0x4] sm:$0xf]
        %v433 = vld [vmem:[%s357 + $0x8] sm:$0xf]
        %v434 = vld [vmem:[%s357 + $0xc] sm:$0xf]
        %vm435 = vcmask 261120
        %v437 = vsel %vm435, %v423, 0
        %v440 = vsel %vm435, %v427, 0
        %442 = vmatprep.subr.bf16.mxu0 0
        %443 = vmatpush1.bf16.xpose.msra.mxu0 0
        %444 = vmatprep.subr.bf16.mxu0 0
        %445 = vmatpush1.bf16.xpose.msra.mxu0 0
        %446 = vmatprep.subr.bf16.mxu0 0
        %447 = vmatpush1.bf16.xpose.msra.mxu0 0
        %448 = vmatprep.subr.bf16.mxu0 0
        %449 = vmatpush1.bf16.xpose.msra.mxu0 0
        %450 = vmatprep.subr.bf16.mxu0 0
        %451 = vmatpush1.bf16.xpose.msra.mxu0 0
        %452 = vmatprep.subr.bf16.mxu0 0
        %453 = vmatpush1.bf16.xpose.msra.mxu0 0
        %454 = vmatprep.subr.bf16.mxu0 0
        %455 = vmatpush1.bf16.xpose.msra.mxu0 0
        %456 = vmatprep.subr.bf16.mxu0 0
        %457 = vmatpush1.bf16.xpose.msra.mxu0 %v440
        %458 = vmatprep.subr.bf16.mxu0 0
        %459 = vmatpush2.bf16.xpose.msra.mxu0 0
        %460 = vmatprep.subr.bf16.mxu0 0
        %461 = vmatpush2.bf16.xpose.msra.mxu0 0
        %462 = vmatprep.subr.bf16.mxu0 0
        %463 = vmatpush2.bf16.xpose.msra.mxu0 0
        %464 = vmatprep.subr.bf16.mxu0 0
        %465 = vmatpush2.bf16.xpose.msra.mxu0 0
        %466 = vmatprep.subr.bf16.mxu0 0
        %467 = vmatpush2.bf16.xpose.msra.mxu0 0
        %468 = vmatprep.subr.bf16.mxu0 0
        %469 = vmatpush2.bf16.xpose.msra.mxu0 0
        %470 = vmatprep.subr.bf16.mxu0 0
        %471 = vmatpush2.bf16.xpose.msra.mxu0 0
        %472 = vmatprep.subr.bf16.mxu0 0
        %473 = vmatpush2.bf16.xpose.msra.mxu0 0
        %474 = vmatprep.mubr.bf16.mxu0 0
        %475 = vmatmul.mubr.bf16.gmra.mxu0 %v437
        %v476 = vpop.f32.mrf.mxu0
        %v477 = vadd.f32 0.0, %v476
        %v478 = vpop.f32.mrf.mxu0
        %v479 = vpop.f32.mrf.mxu0
        %v480 = vpop.f32.mrf.mxu0
        %481 = vdwg.mxu0
        %v483 = vsel %vm435, %v424, 0
        %v486 = vsel %vm435, %v428, 0
        %488 = vmatprep.subr.bf16.mxu0 0
        %489 = vmatpush1.bf16.xpose.msra.mxu0 0
        %490 = vmatprep.subr.bf16.mxu0 0
        %491 = vmatpush1.bf16.xpose.msra.mxu0 0
        %492 = vmatprep.subr.bf16.mxu0 0
        %493 = vmatpush1.bf16.xpose.msra.mxu0 0
        %494 = vmatprep.subr.bf16.mxu0 0
        %495 = vmatpush1.bf16.xpose.msra.mxu0 0
        %496 = vmatprep.subr.bf16.mxu0 0
        %497 = vmatpush1.bf16.xpose.msra.mxu0 0
        %498 = vmatprep.subr.bf16.mxu0 0
        %499 = vmatpush1.bf16.xpose.msra.mxu0 0
        %500 = vmatprep.subr.bf16.mxu0 0
        %501 = vmatpush1.bf16.xpose.msra.mxu0 0
        %502 = vmatprep.subr.bf16.mxu0 0
        %503 = vmatpush1.bf16.xpose.msra.mxu0 %v486
        %504 = vmatprep.subr.bf16.mxu0 0
        %505 = vmatpush2.bf16.xpose.msra.mxu0 0
        %506 = vmatprep.subr.bf16.mxu0 0
        %507 = vmatpush2.bf16.xpose.msra.mxu0 0
        %508 = vmatprep.subr.bf16.mxu0 0
        %509 = vmatpush2.bf16.xpose.msra.mxu0 0
        %510 = vmatprep.subr.bf16.mxu0 0
        %511 = vmatpush2.bf16.xpose.msra.mxu0 0
        %512 = vmatprep.subr.bf16.mxu0 0
        %513 = vmatpush2.bf16.xpose.msra.mxu0 0
        %514 = vmatprep.subr.bf16.mxu0 0
        %515 = vmatpush2.bf16.xpose.msra.mxu0 0
        %516 = vmatprep.subr.bf16.mxu0 0
        %517 = vmatpush2.bf16.xpose.msra.mxu0 0
        %518 = vmatprep.subr.bf16.mxu0 0
        %519 = vmatpush2.bf16.xpose.msra.mxu0 0
        %520 = vmatprep.mubr.bf16.mxu0 0
        %521 = vmatmul.mubr.bf16.gmra.mxu0 %v483
        %v522 = vpop.f32.mrf.mxu0
        %v523 = vadd.f32 0.0, %v522
        %v524 = vpop.f32.mrf.mxu0
        %v525 = vpop.f32.mrf.mxu0
        %v526 = vpop.f32.mrf.mxu0
        %527 = vdwg.mxu0
        %v529 = vsel %vm435, %v425, 0
        %v532 = vsel %vm435, %v429, 0
        %534 = vmatprep.subr.bf16.mxu0 0
        %535 = vmatpush1.bf16.xpose.msra.mxu0 0
        %536 = vmatprep.subr.bf16.mxu0 0
        %537 = vmatpush1.bf16.xpose.msra.mxu0 0
        %538 = vmatprep.subr.bf16.mxu0 0
        %539 = vmatpush1.bf16.xpose.msra.mxu0 0
        %540 = vmatprep.subr.bf16.mxu0 0
        %541 = vmatpush1.bf16.xpose.msra.mxu0 0
        %542 = vmatprep.subr.bf16.mxu0 0
        %543 = vmatpush1.bf16.xpose.msra.mxu0 0
        %544 = vmatprep.subr.bf16.mxu0 0
        %545 = vmatpush1.bf16.xpose.msra.mxu0 0
        %546 = vmatprep.subr.bf16.mxu0 0
        %547 = vmatpush1.bf16.xpose.msra.mxu0 0
        %548 = vmatprep.subr.bf16.mxu0 0
        %549 = vmatpush1.bf16.xpose.msra.mxu0 %v532
        %550 = vmatprep.subr.bf16.mxu0 0
        %551 = vmatpush2.bf16.xpose.msra.mxu0 0
        %552 = vmatprep.subr.bf16.mxu0 0
        %553 = vmatpush2.bf16.xpose.msra.mxu0 0
        %554 = vmatprep.subr.bf16.mxu0 0
        %555 = vmatpush2.bf16.xpose.msra.mxu0 0
        %556 = vmatprep.subr.bf16.mxu0 0
        %557 = vmatpush2.bf16.xpose.msra.mxu0 0
        %558 = vmatprep.subr.bf16.mxu0 0
        %559 = vmatpush2.bf16.xpose.msra.mxu0 0
        %560 = vmatprep.subr.bf16.mxu0 0
        %561 = vmatpush2.bf16.xpose.msra.mxu0 0
        %562 = vmatprep.subr.bf16.mxu0 0
        %563 = vmatpush2.bf16.xpose.msra.mxu0 0
        %564 = vmatprep.subr.bf16.mxu0 0
        %565 = vmatpush2.bf16.xpose.msra.mxu0 0
        %566 = vmatprep.mubr.bf16.mxu0 0
        %567 = vmatmul.mubr.bf16.gmra.mxu0 %v529
        %v568 = vpop.f32.mrf.mxu0
        %v569 = vadd.f32 0.0, %v568
        %v570 = vpop.f32.mrf.mxu0
        %v571 = vpop.f32.mrf.mxu0
        %v572 = vpop.f32.mrf.mxu0
        %573 = vdwg.mxu0
        %v575 = vsel %vm435, %v426, 0
        %v578 = vsel %vm435, %v430, 0
        %580 = vmatprep.subr.bf16.mxu0 0
        %581 = vmatpush1.bf16.xpose.msra.mxu0 0
        %582 = vmatprep.subr.bf16.mxu0 0
        %583 = vmatpush1.bf16.xpose.msra.mxu0 0
        %584 = vmatprep.subr.bf16.mxu0 0
        %585 = vmatpush1.bf16.xpose.msra.mxu0 0
        %586 = vmatprep.subr.bf16.mxu0 0
        %587 = vmatpush1.bf16.xpose.msra.mxu0 0
        %588 = vmatprep.subr.bf16.mxu0 0
        %589 = vmatpush1.bf16.xpose.msra.mxu0 0
        %590 = vmatprep.subr.bf16.mxu0 0
        %591 = vmatpush1.bf16.xpose.msra.mxu0 0
        %592 = vmatprep.subr.bf16.mxu0 0
        %593 = vmatpush1.bf16.xpose.msra.mxu0 0
        %594 = vmatprep.subr.bf16.mxu0 0
        %595 = vmatpush1.bf16.xpose.msra.mxu0 %v578
        %596 = vmatprep.subr.bf16.mxu0 0
        %597 = vmatpush2.bf16.xpose.msra.mxu0 0
        %598 = vmatprep.subr.bf16.mxu0 0
        %599 = vmatpush2.bf16.xpose.msra.mxu0 0
        %600 = vmatprep.subr.bf16.mxu0 0
        %601 = vmatpush2.bf16.xpose.msra.mxu0 0
        %602 = vmatprep.subr.bf16.mxu0 0
        %603 = vmatpush2.bf16.xpose.msra.mxu0 0
        %604 = vmatprep.subr.bf16.mxu0 0
        %605 = vmatpush2.bf16.xpose.msra.mxu0 0
        %606 = vmatprep.subr.bf16.mxu0 0
        %607 = vmatpush2.bf16.xpose.msra.mxu0 0
        %608 = vmatprep.subr.bf16.mxu0 0
        %609 = vmatpush2.bf16.xpose.msra.mxu0 0
        %610 = vmatprep.subr.bf16.mxu0 0
        %611 = vmatpush2.bf16.xpose.msra.mxu0 0
        %612 = vmatprep.mubr.bf16.mxu0 0
        %613 = vmatmul.mubr.bf16.gmra.mxu0 %v575
        %v614 = vpop.f32.mrf.mxu0
        %v615 = vadd.f32 0.0, %v614
        %v616 = vpop.f32.mrf.mxu0
        %v617 = vpop.f32.mrf.mxu0
        %v618 = vpop.f32.mrf.mxu0
        %619 = vdwg.mxu0
        %v620 = vld [vmem:[%s366] sm:$0xff]
        %vm621 = vcmp.eq.f32.partialorder %v620, 0.0
        %v622 = vsel %vm621, 1, 0
        %vm623 = vcmp.eq.s32.totalorder %v622, 1
        %v624 = vsel %vm623, -1e+09, %v477
        %v625 = vsel %vm623, -1e+09, %v523
        %v626 = vsel %vm623, -1e+09, %v569
        %v627 = vsel %vm623, -1e+09, %v615
        %vm628 = vcmask 64512
        %v629 = vsel %vm628, %v624, -inf
        %630 = vmax.xlane.f32.xlu0 %v629
        %v631 = vpop.xlane.xlu0 %630
        %v632 = vsel %vm628, %v625, -inf
        %633 = vmax.xlane.f32.xlu0 %v632
        %v634 = vpop.xlane.xlu0 %633
        %v635 = vsel %vm628, %v626, -inf
        %636 = vmax.xlane.f32.xlu0 %v635
        %v637 = vpop.xlane.xlu0 %636
        %v638 = vsel %vm628, %v627, -inf
        %639 = vmax.xlane.f32.xlu0 %v638
        %v640 = vpop.xlane.xlu0 %639
        %v641 = vsub.f32 %v624, %v631
        %v642 = vsub.f32 %v625, %v634
        %v643 = vsub.f32 %v626, %v637
        %v644 = vsub.f32 %v627, %v640
        %v645 = vmul.f32 %v641, 1.442695
        %v646 = vpow.pop %v645
        %v647 = vmul.f32 %v642, 1.442695
        %v648 = vpow.pop %v647
        %v649 = vmul.f32 %v643, 1.442695
        %v650 = vpow.pop %v649
        %v651 = vmul.f32 %v644, 1.442695
        %v652 = vpow.pop %v651
        %v653 = vsel %vm628, %v646, 0.0
        %654 = vadd.xlane.f32.xlu0 %v653
        %v655 = vpop.xlane.xlu0 %654
        %v656 = vsel %vm628, %v648, 0.0
        %657 = vadd.xlane.f32.xlu0 %v656
        %v658 = vpop.xlane.xlu0 %657
        %v659 = vsel %vm628, %v650, 0.0
        %660 = vadd.xlane.f32.xlu0 %v659
        %v661 = vpop.xlane.xlu0 %660
        %v662 = vsel %vm628, %v652, 0.0
        %663 = vadd.xlane.f32.xlu0 %v662
        %v664 = vpop.xlane.xlu0 %663
        %v665 = vrcp.pop %v655
        %v666 = vrcp.pop %v658
        %v667 = vrcp.pop %v661
        %v668 = vrcp.pop %v664
        %v669 = vmul.f32 %v646, %v665
        %v670 = vmul.f32 %v648, %v666
        %v671 = vmul.f32 %v650, %v667
        %v672 = vmul.f32 %v652, %v668
        %v673 = vpack.c.bf16 %v669, %v669
        %v674 = vpack.c.bf16 %v670, %v670
        %v675 = vpack.c.bf16 %v671, %v671
        %v676 = vpack.c.bf16 %v672, %v672
        %v678 = vsel %vm628, %v673, 0
        %vm680 = vcmask 1043456
        %v682 = vsel %vm680, %v431, 0
        %684 = vmatprep.subr.bf16.mxu0 0
        %685 = vmatpush1.bf16.msra.mxu0 0
        %686 = vmatprep.subr.bf16.mxu0 0
        %687 = vmatpush1.bf16.msra.mxu0 0
        %688 = vmatprep.subr.bf16.mxu0 0
        %689 = vmatpush1.bf16.msra.mxu0 0
        %690 = vmatprep.subr.bf16.mxu0 0
        %691 = vmatpush1.bf16.msra.mxu0 0
        %692 = vmatprep.subr.bf16.mxu0 0
        %693 = vmatpush1.bf16.msra.mxu0 0
        %694 = vmatprep.subr.bf16.mxu0 0
        %695 = vmatpush1.bf16.msra.mxu0 0
        %696 = vmatprep.subr.bf16.mxu0 0
        %697 = vmatpush1.bf16.msra.mxu0 0
        %698 = vmatprep.subr.bf16.mxu0 0
        %699 = vmatpush1.bf16.msra.mxu0 %v682
        %700 = vmatprep.subr.bf16.mxu0 0
        %701 = vmatpush2.bf16.msra.mxu0 0
        %702 = vmatprep.subr.bf16.mxu0 0
        %703 = vmatpush2.bf16.msra.mxu0 0
        %704 = vmatprep.subr.bf16.mxu0 0
        %705 = vmatpush2.bf16.msra.mxu0 0
        %706 = vmatprep.subr.bf16.mxu0 0
        %707 = vmatpush2.bf16.msra.mxu0 0
        %708 = vmatprep.subr.bf16.mxu0 0
        %709 = vmatpush2.bf16.msra.mxu0 0
        %710 = vmatprep.subr.bf16.mxu0 0
        %711 = vmatpush2.bf16.msra.mxu0 0
        %712 = vmatprep.subr.bf16.mxu0 0
        %713 = vmatpush2.bf16.msra.mxu0 0
        %714 = vmatprep.subr.bf16.mxu0 0
        %715 = vmatpush2.bf16.msra.mxu0 0
        %716 = vmatprep.mubr.bf16.mxu0 0
        %717 = vmatmul.mubr.bf16.gmra.mxu0 %v678
        %v718 = vpop.f32.mrf.mxu0
        %v719 = vadd.f32 0.0, %v718
        %v720 = vpop.f32.mrf.mxu0
        %v721 = vpop.f32.mrf.mxu0
        %v722 = vpop.f32.mrf.mxu0
        %723 = vdwg.mxu0
        %v725 = vsel %vm628, %v674, 0
        %v728 = vsel %vm680, %v432, 0
        %730 = vmatprep.subr.bf16.mxu0 0
        %731 = vmatpush1.bf16.msra.mxu0 0
        %732 = vmatprep.subr.bf16.mxu0 0
        %733 = vmatpush1.bf16.msra.mxu0 0
        %734 = vmatprep.subr.bf16.mxu0 0
        %735 = vmatpush1.bf16.msra.mxu0 0
        %736 = vmatprep.subr.bf16.mxu0 0
        %737 = vmatpush1.bf16.msra.mxu0 0
        %738 = vmatprep.subr.bf16.mxu0 0
        %739 = vmatpush1.bf16.msra.mxu0 0
        %740 = vmatprep.subr.bf16.mxu0 0
        %741 = vmatpush1.bf16.msra.mxu0 0
        %742 = vmatprep.subr.bf16.mxu0 0
        %743 = vmatpush1.bf16.msra.mxu0 0
        %744 = vmatprep.subr.bf16.mxu0 0
        %745 = vmatpush1.bf16.msra.mxu0 %v728
        %746 = vmatprep.subr.bf16.mxu0 0
        %747 = vmatpush2.bf16.msra.mxu0 0
        %748 = vmatprep.subr.bf16.mxu0 0
        %749 = vmatpush2.bf16.msra.mxu0 0
        %750 = vmatprep.subr.bf16.mxu0 0
        %751 = vmatpush2.bf16.msra.mxu0 0
        %752 = vmatprep.subr.bf16.mxu0 0
        %753 = vmatpush2.bf16.msra.mxu0 0
        %754 = vmatprep.subr.bf16.mxu0 0
        %755 = vmatpush2.bf16.msra.mxu0 0
        %756 = vmatprep.subr.bf16.mxu0 0
        %757 = vmatpush2.bf16.msra.mxu0 0
        %758 = vmatprep.subr.bf16.mxu0 0
        %759 = vmatpush2.bf16.msra.mxu0 0
        %760 = vmatprep.subr.bf16.mxu0 0
        %761 = vmatpush2.bf16.msra.mxu0 0
        %762 = vmatprep.mubr.bf16.mxu0 0
        %763 = vmatmul.mubr.bf16.gmra.mxu0 %v725
        %v764 = vpop.f32.mrf.mxu0
        %v765 = vadd.f32 0.0, %v764
        %v766 = vpop.f32.mrf.mxu0
        %v767 = vpop.f32.mrf.mxu0
        %v768 = vpop.f32.mrf.mxu0
        %769 = vdwg.mxu0
        %v771 = vsel %vm628, %v675, 0
        %v774 = vsel %vm680, %v433, 0
        %776 = vmatprep.subr.bf16.mxu0 0
        %777 = vmatpush1.bf16.msra.mxu0 0
        %778 = vmatprep.subr.bf16.mxu0 0
        %779 = vmatpush1.bf16.msra.mxu0 0
        %780 = vmatprep.subr.bf16.mxu0 0
        %781 = vmatpush1.bf16.msra.mxu0 0
        %782 = vmatprep.subr.bf16.mxu0 0
        %783 = vmatpush1.bf16.msra.mxu0 0
        %784 = vmatprep.subr.bf16.mxu0 0
        %785 = vmatpush1.bf16.msra.mxu0 0
        %786 = vmatprep.subr.bf16.mxu0 0
        %787 = vmatpush1.bf16.msra.mxu0 0
        %788 = vmatprep.subr.bf16.mxu0 0
        %789 = vmatpush1.bf16.msra.mxu0 0
        %790 = vmatprep.subr.bf16.mxu0 0
        %791 = vmatpush1.bf16.msra.mxu0 %v774
        %792 = vmatprep.subr.bf16.mxu0 0
        %793 = vmatpush2.bf16.msra.mxu0 0
        %794 = vmatprep.subr.bf16.mxu0 0
        %795 = vmatpush2.bf16.msra.mxu0 0
        %796 = vmatprep.subr.bf16.mxu0 0
        %797 = vmatpush2.bf16.msra.mxu0 0
        %798 = vmatprep.subr.bf16.mxu0 0
        %799 = vmatpush2.bf16.msra.mxu0 0
        %800 = vmatprep.subr.bf16.mxu0 0
        %801 = vmatpush2.bf16.msra.mxu0 0
        %802 = vmatprep.subr.bf16.mxu0 0
        %803 = vmatpush2.bf16.msra.mxu0 0
        %804 = vmatprep.subr.bf16.mxu0 0
        %805 = vmatpush2.bf16.msra.mxu0 0
        %806 = vmatprep.subr.bf16.mxu0 0
        %807 = vmatpush2.bf16.msra.mxu0 0
        %808 = vmatprep.mubr.bf16.mxu0 0
        %809 = vmatmul.mubr.bf16.gmra.mxu0 %v771
        %v810 = vpop.f32.mrf.mxu0
        %v811 = vadd.f32 0.0, %v810
        %v812 = vpop.f32.mrf.mxu0
        %v813 = vpop.f32.mrf.mxu0
        %v814 = vpop.f32.mrf.mxu0
        %815 = vdwg.mxu0
        %v817 = vsel %vm628, %v676, 0
        %v820 = vsel %vm680, %v434, 0
        %822 = vmatprep.subr.bf16.mxu0 0
        %823 = vmatpush1.bf16.msra.mxu0 0
        %824 = vmatprep.subr.bf16.mxu0 0
        %825 = vmatpush1.bf16.msra.mxu0 0
        %826 = vmatprep.subr.bf16.mxu0 0
        %827 = vmatpush1.bf16.msra.mxu0 0
        %828 = vmatprep.subr.bf16.mxu0 0
        %829 = vmatpush1.bf16.msra.mxu0 0
        %830 = vmatprep.subr.bf16.mxu0 0
        %831 = vmatpush1.bf16.msra.mxu0 0
        %832 = vmatprep.subr.bf16.mxu0 0
        %833 = vmatpush1.bf16.msra.mxu0 0
        %834 = vmatprep.subr.bf16.mxu0 0
        %835 = vmatpush1.bf16.msra.mxu0 0
        %836 = vmatprep.subr.bf16.mxu0 0
        %837 = vmatpush1.bf16.msra.mxu0 %v820
        %838 = vmatprep.subr.bf16.mxu0 0
        %839 = vmatpush2.bf16.msra.mxu0 0
        %840 = vmatprep.subr.bf16.mxu0 0
        %841 = vmatpush2.bf16.msra.mxu0 0
        %842 = vmatprep.subr.bf16.mxu0 0
        %843 = vmatpush2.bf16.msra.mxu0 0
        %844 = vmatprep.subr.bf16.mxu0 0
        %845 = vmatpush2.bf16.msra.mxu0 0
        %846 = vmatprep.subr.bf16.mxu0 0
        %847 = vmatpush2.bf16.msra.mxu0 0
        %848 = vmatprep.subr.bf16.mxu0 0
        %849 = vmatpush2.bf16.msra.mxu0 0
        %850 = vmatprep.subr.bf16.mxu0 0
        %851 = vmatpush2.bf16.msra.mxu0 0
        %852 = vmatprep.subr.bf16.mxu0 0
        %853 = vmatpush2.bf16.msra.mxu0 0
        %854 = vmatprep.mubr.bf16.mxu0 0
        %855 = vmatmul.mubr.bf16.gmra.mxu0 %v817
        %v856 = vpop.f32.mrf.mxu0
        %v857 = vadd.f32 0.0, %v856
        %v858 = vpop.f32.mrf.mxu0
        %v859 = vpop.f32.mrf.mxu0
        %v860 = vpop.f32.mrf.mxu0
        %861 = vdwg.mxu0
        %863 = vrot.lane.b32.xlu0 %v765, 32
        %v864 = vpop.permute.xlu0 %863
        %867 = vrot.lane.b32.xlu0 %v811, 64
        %v868 = vpop.permute.xlu0 %867
        %871 = vrot.lane.b32.xlu0 %v857, 96
        %v872 = vpop.permute.xlu0 %871
        %v874 = vsel %vm435, %v719, %v864
        %vm875 = vcmask 523264
        %v876 = vsel %vm875, %v874, %v868
        %vm877 = vcmask 785408
        %v878 = vsel %vm877, %v876, %v872
        %879 = vst [vmem:[%s405] sm:$0xff] %v878
        %vm880 = vcmask 60416
        %881 = vst.msk [vmem:[%s412] sm:$0xf] %vm880, %v673
        %882 = vst.msk [vmem:[%s412 + $0x4] sm:$0xf] %vm880, %v674
        %883 = vst.msk [vmem:[%s412 + $0x8] sm:$0xf] %vm880, %v675
        %884 = vst.msk [vmem:[%s412 + $0xc] sm:$0xf] %vm880, %v676
        %s885 = sand.u32 %s177, 1
        %s886 = scalar_lea.sflag [#allocation4], %s885
        %s887 = sand.u32 %s177, 1
        %s888 = smul.addr %s887, 8
        %s889 = scalar_lea.vmem [#allocation10], %s888
        %s890 = sand.u32 %s207, 1
        %s891 = scalar_lea.sflag [#allocation12], %s890
        %s892 = sand.u32 %s207, 1
        %s893 = smul.addr %s892, 16
        %s894 = scalar_lea.vmem [#allocation11], %s893
        // Predicated region
        $region53: #{tpu_custom_call.1} parent=35 // pred_check
          %p895 = pneg %p187
        $region54: #{tpu_custom_call.1} parent=35 // pred_check_branch
          %897 = sbr.rel (%p895) target = $region56
        $region55: #{tpu_custom_call.1} parent=35 // pred_region
          %s899 = ssub.s32 128, 128
          %900 = vsyncadd %s886, %s899
          %s901 = sadd.s32 %s38, %s39
          %s902 = sadd.s32 %s901, %s37
          %s903 = smul.addr %s902, 128
          %s904 = scalar_lea.hbm %s4, %s903
          %s906 = sshll.u32 %s889, 4
          %s907 = int_to_ptr.vmem [resolvable:$true] %s906
          %909 = dma.vmem_to_hbm [thread:$0]  %s907, 128, %s904, %s886
        $region56: #{tpu_custom_call.1} parent=35 // pred_fallthru
          _
        // Predicated region
        $region57: #{tpu_custom_call.1} parent=35 // pred_check
          %p910 = pneg %p217
        $region58: #{tpu_custom_call.1} parent=35 // pred_check_branch
          %912 = sbr.rel (%p910) target = $region60
        $region59: #{tpu_custom_call.1} parent=35 // pred_region
          %s913 = smul.u32 4, %s38
          %s915 = ssub.s32 256, 256
          %916 = vsyncadd %s891, %s915
          %s917 = sadd.s32 %s39, %s913
          %s918 = smul.addr %s37, 4
          %s919 = sadd.s32 %s917, %s918
          %s920 = smul.addr %s919, 64
          %s921 = scalar_lea.hbm %s5, %s920
          %s922 = sshll.u32 %s894, 4
          %s923 = int_to_ptr.vmem [resolvable:$true] %s922
          %928 = dma.vmem_to_hbm [thread:$0]  %s923, 256, %s921, %s891, 64, 64, 4
        $region60: #{tpu_custom_call.1} parent=35 // pred_fallthru
          _
      $region36: #{tpu_custom_call.1} parent=5 // pred_fallthru
        _
      %p929 = scmp.le.s32.totalorder 2, %s27
      // Predicated region
      $region61: #{tpu_custom_call.1} parent=5 // pred_check
        %p930 = pneg %p929
      $region62: #{tpu_custom_call.1} parent=5 // pred_check_branch
        %932 = sbr.rel (%p930) target = $region64
      $region63: #{tpu_custom_call.1} parent=5 // pred_region
        %s933 = ssub.s32 %s27, 2
        // Predicated region
        $region65: #{tpu_custom_call.1} parent=63 // pred_check
          %p934 = pneg %p193
        $region66: #{tpu_custom_call.1} parent=63 // pred_check_branch
          %936 = sbr.rel (%p934) target = $region68
        $region67: #{tpu_custom_call.1} parent=63 // pred_region
          %s937 = sand.u32 %s178, 1
          %s938 = scalar_lea.sflag [#allocation4], %s937
          %s939 = sand.u32 %s178, 1
          %s940 = smul.addr %s939, 8
          %s941 = scalar_lea.vmem [#allocation10], %s940
          %942 = dma.done %s938, 128
        $region68: #{tpu_custom_call.1} parent=63 // pred_fallthru
          _
        // Predicated region
        $region69: #{tpu_custom_call.1} parent=63 // pred_check
          %p943 = pneg %p223
        $region70: #{tpu_custom_call.1} parent=63 // pred_check_branch
          %945 = sbr.rel (%p943) target = $region72
        $region71: #{tpu_custom_call.1} parent=63 // pred_region
          %s946 = sand.u32 %s208, 1
          %s947 = scalar_lea.sflag [#allocation12], %s946
          %s948 = sand.u32 %s208, 1
          %s949 = smul.addr %s948, 16
          %s950 = scalar_lea.vmem [#allocation11], %s949
          %951 = dma.done %s947, 256
        $region72: #{tpu_custom_call.1} parent=63 // pred_fallthru
          _
      $region64: #{tpu_custom_call.1} parent=5 // pred_fallthru
        _
    $region6: #{tpu_custom_call.1} parent=1 // loop_footer
      %s31 = sadd.s32 1, %s27
    $region7: #{tpu_custom_call.1} parent=1 // loop_footer_branch
      %26 = sbr.rel target = $region3
    $region8: #{tpu_custom_call.1} parent=1 // loop_exit
      _
    %952 = vsyncpa [#allocation3], 1
    %s953 = scalar_lea.sflag [#allocation3], 1
    %954 = vsyncpa %s953, 1
    %955 = vsyncpa [#allocation6], 1
    %s956 = scalar_lea.sflag [#allocation6], 1
    %957 = vsyncpa %s956, 1
    %958 = vsyncpa [#allocation9], 1
    %s959 = scalar_lea.sflag [#allocation9], 1
    %960 = vsyncpa %s959, 1
    %961 = vsyncpa [#allocation4], 1
    %s962 = scalar_lea.sflag [#allocation4], 1
    %963 = vsyncpa %s962, 1
    %964 = vsyncpa [#allocation12], 1
    %s965 = scalar_lea.sflag [#allocation12], 1
    %966 = vsyncpa %s965, 1

</llo_original>
